<compile_context>
chip_gen: v5e
topology: v5e:2x2
jax: 0.10.0
libtpu: 0.0.40
codegen_flags: <defaults>
</compile_context>

<pallas_src>
import jax
import jax.numpy as jnp
from jax.experimental import pallas as pl
from jax.experimental.pallas import tpu as pltpu

_HIDDEN_PAD = 128    # lane-dense intermediate h
_MIN_SPLIT = 256     # batches >= 2*_MIN_SPLIT get >= 2 grid steps (v7x dual-TC)


def _round_up(n, m):
    return ((n + m - 1) // m) * m


def _policy_kernel(x_ref, w1_ref, b1_ref, w2_ref, b2_ref, out_ref):
    # fc1 + ReLU: MXU matmul with f32 accumulation; bias-add / ReLU on the VPU
    # in f32 over a lane-dense (tb, 128) h.
    h = jnp.dot(x_ref[...], w1_ref[...], preferred_element_type=jnp.float32)
    h = jnp.maximum(h + b1_ref[...], 0.0)
    # fc2: cast the activation to the (pre-cast) weight dtype only for the MXU.
    logits = jnp.dot(h.astype(w2_ref.dtype), w2_ref[...],
                     preferred_element_type=jnp.float32)
    out_ref[...] = (logits + b2_ref[...]).astype(out_ref.dtype)


def prepare_params(w1, b1, w2, b2, matmul_dtype=jnp.float32):
    """Pad hidden to 128 and cast MXU operands ONCE, outside the per-call path.

    w1: [state_dim, hidden] (transposed vs. PyTorch), b1: [hidden]
    w2: [hidden, num_actions],                        b2: [num_actions]
    """
    state_dim, hidden = w1.shape
    num_actions = w2.shape[1]
    h_pad = max(_HIDDEN_PAD, _round_up(hidden, 128))

    w1_p = jnp.zeros((state_dim, h_pad), matmul_dtype)
    w1_p = w1_p.at[:, :hidden].set(w1.astype(matmul_dtype))
    b1_p = jnp.zeros((1, h_pad), jnp.float32)
    b1_p = b1_p.at[0, :hidden].set(jnp.asarray(b1, jnp.float32))
    w2_p = jnp.zeros((h_pad, num_actions), matmul_dtype)
    w2_p = w2_p.at[:hidden, :].set(w2.astype(matmul_dtype))
    b2_p = jnp.asarray(b2, jnp.float32).reshape(1, num_actions)
    return w1_p, b1_p, w2_p, b2_p


def policy_net_forward(x, params, *, block_b=1024):
    """Fused PolicyNet forward: logits = relu(x @ W1 + b1) @ W2 + b2.

    x:      [batch, state_dim] (cast to the prepared weight dtype for the MXU)
    params: output of prepare_params()
    returns [batch, num_actions] float32 logits.
    """
    w1_p, b1_p, w2_p, b2_p = params
    batch, state_dim = x.shape
    h_pad = w1_p.shape[1]
    num_actions = w2_p.shape[1]
    feed_dtype = w1_p.dtype

    # Near-equal, 8-row-aligned batch tiles: bounds padding waste to < 8 rows
    # per tile and keeps >= 2 grid steps for large batches (v7x dual-TC).
    num_tiles = pl.cdiv(batch, block_b)
    if num_tiles == 1 and batch >= 2 * _MIN_SPLIT:
        num_tiles = 2
    tb = _round_up(pl.cdiv(batch, num_tiles), 8)
    b_pad = num_tiles * tb

    x_p = x.astype(feed_dtype)
    if b_pad != batch:
        x_p = jnp.zeros((b_pad, state_dim), feed_dtype).at[:batch].set(x_p)

    vmem = pltpu.MemorySpace.VMEM
    out_padded = pl.pallas_call(
        _policy_kernel,
        out_shape=jax.ShapeDtypeStruct((b_pad, num_actions), jnp.float32),
        grid=(num_tiles,),
        in_specs=[
            # x: tiled along the batch axis at its true feature width.
            pl.BlockSpec((tb, state_dim), lambda i: (i, 0), memory_space=vmem),
            # Weights / biases: whole-array, grid-invariant, VMEM-resident.
            pl.BlockSpec((state_dim, h_pad), lambda i: (0, 0), memory_space=vmem),
            pl.BlockSpec((1, h_pad), lambda i: (0, 0), memory_space=vmem),
            pl.BlockSpec((h_pad, num_actions), lambda i: (0, 0), memory_space=vmem),
            pl.BlockSpec((1, num_actions), lambda i: (0, 0), memory_space=vmem),
        ],
        out_specs=pl.BlockSpec((tb, num_actions), lambda i: (i, 0),
                               memory_space=vmem),
        compiler_params=pltpu.CompilerParams(
            dimension_semantics=("parallel",),
            vmem_limit_bytes=32 * 1024 * 1024,
        ),
    )(x_p, w1_p, b1_p, w2_p, b2_p)

    return out_padded[:batch] if b_pad != batch else out_padded


def init_params(key, state_dim=5, hidden_dim=32, num_actions=4):
    """Deterministic init mirroring nn.Linear's U(-1/sqrt(fan_in), 1/sqrt(fan_in))."""
    k1, k2, k3, k4 = jax.random.split(key, 4)
    bound1 = 1.0 / jnp.sqrt(state_dim)
    bound2 = 1.0 / jnp.sqrt(hidden_dim)
    # Stored as [in, out] (transpose of PyTorch's [out, in]) for x @ W.
    w1 = jax.random.uniform(k1, (state_dim, hidden_dim), jnp.float32, -bound1, bound1)
    b1 = jax.random.uniform(k2, (hidden_dim,), jnp.float32, -bound1, bound1)
    w2 = jax.random.uniform(k3, (hidden_dim, num_actions), jnp.float32, -bound2, bound2)
    b2 = jax.random.uniform(k4, (num_actions,), jnp.float32, -bound2, bound2)
    return w1, b1, w2, b2


if __name__ == "__main__":
    state_dim, hidden_dim, num_actions = 5, 32, 4

    key = jax.random.PRNGKey(0)
    kx, kp = jax.random.split(key)
    w1, b1, w2, b2 = init_params(kp, state_dim, hidden_dim, num_actions)

    def ref_forward(xx):
        return jnp.maximum(xx @ w1 + b1[None, :], 0.0) @ w2 + b2[None, :]

    # Pad / cast weights once; reuse across every forward call.
    params_f32 = prepare_params(w1, b1, w2, b2)

    # Single-tile case (batch=8, one grid step, no batch padding).
    x8 = jax.random.normal(kx, (8, state_dim), jnp.float32)
    logits8 = jax.block_until_ready(policy_net_forward(x8, params_f32))
    assert logits8.shape == (8, num_actions)
    assert jnp.allclose(logits8, ref_forward(x8), atol=1e-4), "f32 mismatch (batch=8)"

    # Multi-tile case: batch=40, block_b=16 -> 3 grid steps, rows padded 40 -> 48.
    x40 = jax.random.normal(jax.random.fold_in(kx, 1), (40, state_dim), jnp.float32)
    logits40 = jax.block_until_ready(
        policy_net_forward(x40, params_f32, block_b=16))
    assert logits40.shape == (40, num_actions)
    assert jnp.allclose(logits40, ref_forward(x40), atol=1e-4), "f32 mismatch (batch=40)"

    # bf16 MXU-input path (weights pre-cast once, x cast in the wrapper,
    # f32 accumulation and f32 bias/ReLU); looser tolerance vs. f32 reference.
    params_bf16 = prepare_params(w1, b1, w2, b2, matmul_dtype=jnp.bfloat16)
    logits_bf16 = jax.block_until_ready(
        policy_net_forward(x40, params_bf16, block_b=16))
    assert jnp.allclose(logits_bf16, ref_forward(x40), atol=5e-2), "bf16 mismatch"

    print("KERNEL_OK")
</pallas_src>

<mosaic_0001>
module attributes {stable_mosaic.version = 11 : i64} {
  func.func @_policy_kernel(%arg0: i32, %arg1: memref<8x5xf32, #tpu.memory_space<vmem>>, %arg2: memref<5x128xf32, #tpu.memory_space<vmem>>, %arg3: memref<1x128xf32, #tpu.memory_space<vmem>>, %arg4: memref<128x4xf32, #tpu.memory_space<vmem>>, %arg5: memref<1x4xf32, #tpu.memory_space<vmem>>, %arg6: memref<8x4xf32, #tpu.memory_space<vmem>>) attributes {dimension_semantics = [#tpu.dimension_semantics<parallel>], iteration_bounds = array<i64: 1>, scalar_prefetch = 0 : i64, scratch_operands = 0 : i64, tpu.core_type = #tpu.core_type<tc>, window_params = [{transform_indices = @transform_0, window_bounds = array<i64: 8, 5>}, {pipeline_mode = #tpu.pipeline_mode<synchronous>, transform_indices = @transform_1, window_bounds = array<i64: 5, 128>}, {pipeline_mode = #tpu.pipeline_mode<synchronous>, transform_indices = @transform_2, window_bounds = array<i64: 1, 128>}, {pipeline_mode = #tpu.pipeline_mode<synchronous>, transform_indices = @transform_3, window_bounds = array<i64: 128, 4>}, {pipeline_mode = #tpu.pipeline_mode<synchronous>, transform_indices = @transform_4, window_bounds = array<i64: 1, 4>}, {transform_indices = @transform_5, window_bounds = array<i64: 8, 4>}]} {
    %c0 = arith.constant 0 : index
    %c0_0 = arith.constant 0 : index
    %0 = vector.load %arg1[%c0, %c0_0] : memref<8x5xf32, #tpu.memory_space<vmem>>, vector<8x5xf32>
    %c0_1 = arith.constant 0 : index
    %c0_2 = arith.constant 0 : index
    %1 = vector.load %arg2[%c0_1, %c0_2] : memref<5x128xf32, #tpu.memory_space<vmem>>, vector<5x128xf32>
    %cst = arith.constant dense<0.000000e+00> : vector<8x128xf32>
    %2 = tpu.matmul %0, %1, %cst {dimension_numbers = #tpu.dot_dimension_numbers<[1], [0], [0], [1], [0, 0, 1, 1], [], []>} : vector<8x5xf32>, vector<5x128xf32>, vector<8x128xf32> -> vector<8x128xf32>
    %c0_3 = arith.constant 0 : index
    %c0_4 = arith.constant 0 : index
    %3 = vector.load %arg3[%c0_3, %c0_4] : memref<1x128xf32, #tpu.memory_space<vmem>>, vector<1x128xf32>
    %4 = vector.broadcast %3 : vector<1x128xf32> to vector<8x128xf32>
    %5 = arith.addf %2, %4 : vector<8x128xf32>
    %cst_5 = arith.constant 0.000000e+00 : f32
    %6 = vector.broadcast %cst_5 : f32 to vector<8x128xf32>
    %7 = arith.maximumf %5, %6 : vector<8x128xf32>
    %c0_6 = arith.constant 0 : index
    %c0_7 = arith.constant 0 : index
    %8 = vector.load %arg4[%c0_6, %c0_7] : memref<128x4xf32, #tpu.memory_space<vmem>>, vector<128x4xf32>
    %cst_8 = arith.constant dense<0.000000e+00> : vector<8x4xf32>
    %9 = tpu.matmul %7, %8, %cst_8 {dimension_numbers = #tpu.dot_dimension_numbers<[1], [0], [0], [1], [0, 0, 1, 1], [], []>} : vector<8x128xf32>, vector<128x4xf32>, vector<8x4xf32> -> vector<8x4xf32>
    %c0_9 = arith.constant 0 : index
    %c0_10 = arith.constant 0 : index
    %10 = vector.load %arg5[%c0_9, %c0_10] : memref<1x4xf32, #tpu.memory_space<vmem>>, vector<1x4xf32>
    %11 = vector.broadcast %10 : vector<1x4xf32> to vector<8x4xf32>
    %12 = arith.addf %9, %11 : vector<8x4xf32>
    %c0_11 = arith.constant 0 : index
    %c0_12 = arith.constant 0 : index
    %13 = vector.load %arg6[%c0_11, %c0_12] : memref<8x4xf32, #tpu.memory_space<vmem>>, vector<8x4xf32>
    tpu.vector_store %arg6[%c0_11, %c0_12], %12 {strides = array<i32>} : memref<8x4xf32, #tpu.memory_space<vmem>>, vector<8x4xf32>,
    return
  }
  func.func @transform_0(%arg0: i32) -> (i32, i32) {
    %c0_i32 = arith.constant 0 : i32
    %c0_i32_0 = arith.constant 0 : i32
    return %arg0, %c0_i32 : i32, i32
  }
  func.func @transform_1(%arg0: i32) -> (i32, i32) {
    %c0_i32 = arith.constant 0 : i32
    %c0_i32_0 = arith.constant 0 : i32
    %c0_i32_1 = arith.constant 0 : i32
    return %c0_i32, %c0_i32_0 : i32, i32
  }
  func.func @transform_2(%arg0: i32) -> (i32, i32) {
    %c0_i32 = arith.constant 0 : i32
    %c0_i32_0 = arith.constant 0 : i32
    %c0_i32_1 = arith.constant 0 : i32
    return %c0_i32, %c0_i32_0 : i32, i32
  }
  func.func @transform_3(%arg0: i32) -> (i32, i32) {
    %c0_i32 = arith.constant 0 : i32
    %c0_i32_0 = arith.constant 0 : i32
    %c0_i32_1 = arith.constant 0 : i32
    return %c0_i32, %c0_i32_0 : i32, i32
  }
  func.func @transform_4(%arg0: i32) -> (i32, i32) {
    %c0_i32 = arith.constant 0 : i32
    %c0_i32_0 = arith.constant 0 : i32
    %c0_i32_1 = arith.constant 0 : i32
    return %c0_i32, %c0_i32_0 : i32, i32
  }
  func.func @transform_5(%arg0: i32) -> (i32, i32) {
    %c0_i32 = arith.constant 0 : i32
    %c0_i32_0 = arith.constant 0 : i32
    return %arg0, %c0_i32 : i32, i32
  }
}

</mosaic_0001>

<llo_original>
// kernel: tpu_custom_call.1
$region0: #{tpu_custom_call.1}
  #allocation0 [shape = 'u32[]', space=smem, size = 0x4, offset = 0x4, fixed_abs, tag = 'smem constant byte address 0x4 - core index']
  #allocation1 [shape = 'u32[72,128]{1,0:T(1,128)}', space=vmem, size = 0x9000, scoped, tag = 'internal scratch']
  %s0 = inlined_call_operand.vmem [shape: f32[8,5], index: 0, kind: input, shape index: {}]
  %s1 = inlined_call_operand.vmem [shape: f32[5,128], index: 1, kind: input, shape index: {}]
  %s2 = inlined_call_operand.vmem [shape: f32[1,128], index: 2, kind: input, shape index: {}]
  %s3 = inlined_call_operand.vmem [shape: f32[128,4], index: 3, kind: input, shape index: {}]
  %s4 = inlined_call_operand.vmem [shape: f32[1,4], index: 4, kind: input, shape index: {}]
  %s5 = inlined_call_operand.vmem [shape: f32[8,4], index: 5, kind: output, shape index: {}]
  %s6 = sld [smem:[#allocation0]]
  $region30: #{tpu_custom_call.1} parent=0
    _
  %s8 = ssub.s32 1, %s6
  %s9 = scalar_select 0, %s8, %s6
  // Predicated region
  $region2: #{tpu_custom_call.1} parent=0 // pred_check
    _
  $region3: #{tpu_custom_call.1} parent=0 // pred_check_branch
    %11 = sbr.rel (0) target = $region5
  $region4: #{tpu_custom_call.1} parent=0 // pred_region
    _
  $region5: #{tpu_custom_call.1} parent=0 // pred_fallthru
    _
  // Predicated region
  $region6: #{tpu_custom_call.1} parent=0 // pred_check
    _
  $region7: #{tpu_custom_call.1} parent=0 // pred_check_branch
    %13 = sbr.rel (0) target = $region9
  $region8: #{tpu_custom_call.1} parent=0 // pred_region
    _
  $region9: #{tpu_custom_call.1} parent=0 // pred_fallthru
    _
  // Predicated region
  $region10: #{tpu_custom_call.1} parent=0 // pred_check
    _
  $region11: #{tpu_custom_call.1} parent=0 // pred_check_branch
    %15 = sbr.rel (0) target = $region13
  $region12: #{tpu_custom_call.1} parent=0 // pred_region
    _
  $region13: #{tpu_custom_call.1} parent=0 // pred_fallthru
    _
  // Predicated region
  $region14: #{tpu_custom_call.1} parent=0 // pred_check
    _
  $region15: #{tpu_custom_call.1} parent=0 // pred_check_branch
    %17 = sbr.rel (0) target = $region17
  $region16: #{tpu_custom_call.1} parent=0 // pred_region
    _
  $region17: #{tpu_custom_call.1} parent=0 // pred_fallthru
    _
  // Predicated region
  $region18: #{tpu_custom_call.1} parent=0 // pred_check
    _
  $region19: #{tpu_custom_call.1} parent=0 // pred_check_branch
    %19 = sbr.rel (0) target = $region21
  $region20: #{tpu_custom_call.1} parent=0 // pred_region
    _
  $region21: #{tpu_custom_call.1} parent=0 // pred_fallthru
    _
  %v20 = vld [vmem:[%s0] sm:$0xff]
  %v21 = vld [vmem:[%s1] sm:$0x1f]
  %v22 = vld [vmem:[%s2] sm:$0x1]
  %v24 = vperm.slane %v22, 0
  %vm26 = vcmask 39936
  %v28 = vsel %vm26, %v20, 0
  %vm30 = vcmask 1044480
  %v32 = vsel %vm30, %v21, 0
  %34 = vmatpush.msra.mxu0 0.0
  %35 = vmatpush.msra.mxu0 0.0
  %36 = vmatpush.msra.mxu0 0.0
  %37 = vmatpush.msra.mxu0 0.0
  %38 = vmatpush.msra.mxu0 0.0
  %39 = vmatpush.msra.mxu0 0.0
  %40 = vmatpush.msra.mxu0 0.0
  %41 = vmatpush.msra.mxu0 0.0
  %42 = vmatpush.msra.mxu0 0.0
  %43 = vmatpush.msra.mxu0 0.0
  %44 = vmatpush.msra.mxu0 0.0
  %45 = vmatpush.msra.mxu0 0.0
  %46 = vmatpush.msra.mxu0 0.0
  %47 = vmatpush.msra.mxu0 0.0
  %48 = vmatpush.msra.mxu0 0.0
  %49 = vmatpush.msra.mxu0 %v32
  %50 = vmatmul.f32.gmra.mxu0 %v28
  %v51 = vpop.f32.mrf.mxu0
  %v52 = vadd.f32 %v24, %v51
  %53 = vdwg.mxu0
  %v54 = vmax.f32 %v52, 0.0
  %v55 = vld [vmem:[%s3] sm:$0xff]
  %v56 = vld [vmem:[%s3 + $0x8] sm:$0xff]
  %v57 = vld [vmem:[%s3 + $0x10] sm:$0xff]
  %v58 = vld [vmem:[%s3 + $0x18] sm:$0xff]
  %v59 = vld [vmem:[%s3 + $0x20] sm:$0xff]
  %v60 = vld [vmem:[%s3 + $0x28] sm:$0xff]
  %v61 = vld [vmem:[%s3 + $0x30] sm:$0xff]
  %v62 = vld [vmem:[%s3 + $0x38] sm:$0xff]
  %v63 = vld [vmem:[%s3 + $0x40] sm:$0xff]
  %v64 = vld [vmem:[%s3 + $0x48] sm:$0xff]
  %v65 = vld [vmem:[%s3 + $0x50] sm:$0xff]
  %v66 = vld [vmem:[%s3 + $0x58] sm:$0xff]
  %v67 = vld [vmem:[%s3 + $0x60] sm:$0xff]
  %v68 = vld [vmem:[%s3 + $0x68] sm:$0xff]
  %v69 = vld [vmem:[%s3 + $0x70] sm:$0xff]
  %v70 = vld [vmem:[%s3 + $0x78] sm:$0xff]
  %v71 = vld [vmem:[%s4] sm:$0x1]
  %v73 = vperm.slane %v71, 0
  %75 = vmatpush.msra.mxu0 %v70
  %76 = vmatpush.msra.mxu0 %v69
  %77 = vmatpush.msra.mxu0 %v68
  %78 = vmatpush.msra.mxu0 %v67
  %79 = vmatpush.msra.mxu0 %v66
  %80 = vmatpush.msra.mxu0 %v65
  %81 = vmatpush.msra.mxu0 %v64
  %82 = vmatpush.msra.mxu0 %v63
  %83 = vmatpush.msra.mxu0 %v62
  %84 = vmatpush.msra.mxu0 %v61
  %85 = vmatpush.msra.mxu0 %v60
  %86 = vmatpush.msra.mxu0 %v59
  %87 = vmatpush.msra.mxu0 %v58
  %88 = vmatpush.msra.mxu0 %v57
  %89 = vmatpush.msra.mxu0 %v56
  %90 = vmatpush.msra.mxu0 %v55
  %91 = vmatmul.f32.gmra.mxu0 %v54
  %v92 = vpop.f32.mrf.mxu0
  %v93 = vadd.f32 %v73, %v92
  %94 = vdwg.mxu0
  %vm95 = vcmask 31744
  %96 = vst.msk [vmem:[%s5] sm:$0xff] %vm95, %v93
  // Predicated region
  $region22: #{tpu_custom_call.1} parent=0 // pred_check
    _
  $region23: #{tpu_custom_call.1} parent=0 // pred_check_branch
    %98 = sbr.rel (0) target = $region25
  $region24: #{tpu_custom_call.1} parent=0 // pred_region
    _
  $region25: #{tpu_custom_call.1} parent=0 // pred_fallthru
    _
  // Predicated region
  $region26: #{tpu_custom_call.1} parent=0 // pred_check
    _
  $region27: #{tpu_custom_call.1} parent=0 // pred_check_branch
    %100 = sbr.rel (0) target = $region29
  $region28: #{tpu_custom_call.1} parent=0 // pred_region
    _
  $region29: #{tpu_custom_call.1} parent=0 // pred_fallthru
    _

</llo_original>
